<compile_context>
chip_gen: v6e
topology: v6e:2x2x1
jax: 0.10.0
libtpu: 0.0.40
codegen_flags: <defaults>
</compile_context>

<pallas_src>
import jax
import jax.numpy as jnp
from jax.experimental import pallas as pl
from jax.experimental.pallas import tpu as pltpu


_MIN_BLOCK_ROWS = 512  # amortization floor when splitting for megacore


def _round_up(x: int, m: int) -> int:
    return ((x + m - 1) // m) * m


def _embed_block_kernel(ids_ref, table_ref, out_ref):
    # ids_ref   : VMEM (1, 1, TB) int32  -- category ids for this row block
    # table_ref : VMEM (C, E)     float  -- full embedding table (resident)
    # out_ref   : VMEM (TB, E)    float  -- gathered embedding rows
    c = table_ref.shape[0]
    tb = out_ref.shape[0]

    ids = ids_ref[0]                                            # (1, TB), lane-dense
    row = jax.lax.broadcasted_iota(jnp.int32, (c, tb), 0)       # (C, TB) sublane iota
    onehot = (row == ids).astype(table_ref.dtype)               # (C, TB)

    # Exact row selection on the MXU: out[t, :] = table[ids[t], :].
    # Contract lhs dim 0 (no explicit transpose); HIGHEST precision keeps the
    # f32 gather exact (no bf16 demotion of the table inside the MXU).
    out_ref[...] = jax.lax.dot_general(
        onehot,
        table_ref[...],
        dimension_numbers=(((0,), (0,)), ((), ())),
        preferred_element_type=jnp.float32,
        precision=jax.lax.Precision.HIGHEST,
    ).astype(out_ref.dtype)


def category_layer(inputs, emb_table, *, block_rows: int = 4096):
    """Embedding lookup + flatten, matching Categorylayer.forward.

    inputs   : integer array of any shape (category ids)
    emb_table: (categories, E) embedding weight
    returns  : (N, E) with N = inputs.size  (matches .view(-1, output_dim))
    """
    ids = inputs.reshape(-1).astype(jnp.int32)
    n = ids.shape[0]
    c, e = emb_table.shape

    # Row-block size (the amortization knob):
    #   * default 4096 rows so per-step overhead is amortized over a 1-2 MiB
    #     lane-dense output tile,
    #   * capped so there are >= 2 blocks once N is large enough (v7x megacore
    #     sharding of the "parallel" axis), never below _MIN_BLOCK_ROWS,
    #   * always a multiple of 8 (sublane alignment of the (TB, E) out block).
    tb = min(block_rows, _round_up(n, 8))
    if n >= 2 * _MIN_BLOCK_ROWS:
        tb = min(tb, max(_MIN_BLOCK_ROWS, _round_up(pl.cdiv(n, 2), 8)))
    n_blocks = pl.cdiv(n, tb)

    # Only the tiny id vector is padded (4 B/row); the output is written
    # directly at shape (n, e) and Pallas drops the OOB rows of the last
    # partial block, so there is no pad-then-slice round trip in HBM.
    ids_blocks = jnp.pad(ids, (0, n_blocks * tb - n)).reshape(n_blocks, 1, tb)

    itemsize = jnp.dtype(emb_table.dtype).itemsize
    cost = pl.CostEstimate(
        flops=2 * n * c * e,
        transcendentals=0,
        bytes_accessed=n_blocks * tb * 4 + c * e * itemsize + n * e * itemsize,
    )

    grid_spec = pltpu.PrefetchScalarGridSpec(
        num_scalar_prefetch=0,
        grid=(n_blocks,),
        in_specs=[
            # Ids for this row block: lane-dense (1, 1, TB), rides the pipeline.
            pl.BlockSpec((1, 1, tb), lambda i: (i, 0, 0)),
            # Whole embedding table, resident in VMEM across the grid.
            # (For MiB-scale tables add pipeline_mode=pl.Buffered(1) here.)
            pl.BlockSpec((c, e), lambda i: (0, 0)),
        ],
        out_specs=pl.BlockSpec((tb, e), lambda i: (i, 0)),
    )

    out = pl.pallas_call(
        _embed_block_kernel,
        out_shape=jax.ShapeDtypeStruct((n, e), emb_table.dtype),
        grid_spec=grid_spec,
        compiler_params=pltpu.CompilerParams(
            # Row blocks are independent -> lets v7x shard across its 2 TCs.
            dimension_semantics=("parallel",),
            # Same as the v6e/v7x default; raises v5e's 16 MiB scoped default
            # so large TB tiles never force a VMEM-limit failure.
            vmem_limit_bytes=32 * 1024 * 1024,
        ),
        cost_estimate=cost,
    )(ids_blocks, emb_table)

    return out


if __name__ == "__main__":
    # Small, deterministic setup consistent with the module's __init__:
    #   categories = 16, args.categ_embed_size = 128
    categories = 16
    categ_embed_size = 128   # lane-dense embedding width
    batch, seq = 2, 8        # inputs: (batch, seq) integer category ids

    key = jax.random.PRNGKey(0)
    k_emb, k_ids, k_ids2 = jax.random.split(key, 3)

    # Deterministic "weights" (nn.Embedding weight ~ N(0,1)).
    emb_table = jax.random.normal(
        k_emb, (categories, categ_embed_size), dtype=jnp.float32
    )
    inputs = jax.random.randint(
        k_ids, (batch, seq), minval=0, maxval=categories, dtype=jnp.int32
    )

    out = category_layer(inputs, emb_table)
    out = jax.block_until_ready(out)

    ref = jnp.take(emb_table, inputs.reshape(-1), axis=0)
    assert out.shape == (batch * seq, categ_embed_size), out.shape
    assert jnp.allclose(out, ref), "Pallas embedding gather mismatch vs reference"

    # Second check: multi-block grid with a partial (masked) last output block.
    inputs2 = jax.random.randint(
        k_ids2, (7, 300), minval=0, maxval=categories, dtype=jnp.int32
    )
    out2 = jax.block_until_ready(category_layer(inputs2, emb_table))
    ref2 = jnp.take(emb_table, inputs2.reshape(-1), axis=0)
    assert out2.shape == (7 * 300, categ_embed_size), out2.shape
    assert jnp.allclose(out2, ref2), "Pallas multi-block gather mismatch vs reference"

    print("KERNEL_OK")
</pallas_src>

<mosaic_0001>
module attributes {stable_mosaic.version = 11 : i64} {
  func.func @_embed_block_kernel(%arg0: i32, %arg1: memref<1x1x16xi32, #tpu.memory_space<vmem>>, %arg2: memref<16x128xf32, #tpu.memory_space<vmem>>, %arg3: memref<16x128xf32, #tpu.memory_space<vmem>>) attributes {dimension_semantics = [#tpu.dimension_semantics<parallel>], iteration_bounds = array<i64: 1>, scalar_prefetch = 0 : i64, scratch_operands = 0 : i64, tpu.core_type = #tpu.core_type<tc>, window_params = [{transform_indices = @transform_0, window_bounds = array<i64: 1, 1, 16>}, {pipeline_mode = #tpu.pipeline_mode<synchronous>, transform_indices = @transform_1, window_bounds = array<i64: 16, 128>}, {transform_indices = @transform_2, window_bounds = array<i64: 16, 128>}]} {
    %c0 = arith.constant 0 : index
    %c0_0 = arith.constant 0 : index
    %c0_1 = arith.constant 0 : index
    %0 = vector.load %arg1[%c0, %c0_0, %c0_1] : memref<1x1x16xi32, #tpu.memory_space<vmem>>, vector<1x1x16xi32>
    %1 = vector.shape_cast %0 : vector<1x1x16xi32> to vector<1x16xi32>
    %2 = tpu.iota {dimensions = array<i32: 0>} : vector<16x16xi32>
    %3 = vector.broadcast %1 : vector<1x16xi32> to vector<16x16xi32>
    %4 = arith.cmpi eq, %2, %3 : vector<16x16xi32>
    %5 = arith.extui %4 : vector<16x16xi1> to vector<16x16xi32>
    %6 = arith.sitofp %5 : vector<16x16xi32> to vector<16x16xf32>
    %c0_2 = arith.constant 0 : index
    %c0_3 = arith.constant 0 : index
    %7 = vector.load %arg2[%c0_2, %c0_3] : memref<16x128xf32, #tpu.memory_space<vmem>>, vector<16x128xf32>
    %cst = arith.constant dense<0.000000e+00> : vector<16x128xf32>
    %8 = tpu.matmul %6, %7, %cst {dimension_numbers = #tpu.dot_dimension_numbers<[0], [0], [1], [1], [0, 1, 1, 1], [], []>, precision = #tpu.contract_precision<fp32>} : vector<16x16xf32>, vector<16x128xf32>, vector<16x128xf32> -> vector<16x128xf32>
    %c0_4 = arith.constant 0 : index
    %c0_5 = arith.constant 0 : index
    %9 = vector.load %arg3[%c0_4, %c0_5] : memref<16x128xf32, #tpu.memory_space<vmem>>, vector<16x128xf32>
    tpu.vector_store %arg3[%c0_4, %c0_5], %8 {strides = array<i32>} : memref<16x128xf32, #tpu.memory_space<vmem>>, vector<16x128xf32>,
    return
  }
  func.func @transform_0(%arg0: i32) -> (i32, i32, i32) {
    %c0_i32 = arith.constant 0 : i32
    %c0_i32_0 = arith.constant 0 : i32
    %c0_i32_1 = arith.constant 0 : i32
    return %arg0, %c0_i32, %c0_i32_0 : i32, i32, i32
  }
  func.func @transform_1(%arg0: i32) -> (i32, i32) {
    %c0_i32 = arith.constant 0 : i32
    %c0_i32_0 = arith.constant 0 : i32
    %c0_i32_1 = arith.constant 0 : i32
    return %c0_i32, %c0_i32_0 : i32, i32
  }
  func.func @transform_2(%arg0: i32) -> (i32, i32) {
    %c0_i32 = arith.constant 0 : i32
    %c0_i32_0 = arith.constant 0 : i32
    return %arg0, %c0_i32 : i32, i32
  }
}

</mosaic_0001>

<llo_original>
// kernel: tpu_custom_call.1
$region0: #{tpu_custom_call.1}
  #allocation0 [shape = 'u32[]', space=smem, size = 0x4, offset = 0x4, fixed_abs, tag = 'smem constant byte address 0x4 - core index']
  #allocation1 [shape = 'u32[144,128]{1,0:T(1,128)}', space=vmem, size = 0x12000, scoped, tag = 'internal scratch']
  %s0 = inlined_call_operand.hbm [shape: s32[1,1,16], index: 0, kind: input, shape index: {}]
  %s1 = inlined_call_operand.hbm [shape: f32[16,128], index: 1, kind: input, shape index: {}]
  %s2 = inlined_call_operand.hbm [shape: f32[16,128], index: 2, kind: output, shape index: {}]
  %s3 = sld [smem:[#allocation0]]
  $region26: #{tpu_custom_call.1} parent=0
    _
  %s5 = ssub.s32 1, %s3
  %s6 = scalar_select 0, %s5, %s3
  $region1: #{tpu_custom_call.1} parent=0
    #allocation2 [shape = 'u8[512]{0}', space=vmem, size = 0x400, scoped, tag = 'input window, operand 0, single buffered']
    #allocation3 [shape = 's32[1]{0}', space=sflag, size = 0x4, scoped, tag = 'scoped memory for tpu_custom_call.1']
    #allocation4 [shape = 's32[1]{0}', space=sflag, size = 0x4, scoped, tag = 'scoped memory for tpu_custom_call.1']
    #allocation5 [shape = 'u8[8192]{0}', space=vmem, size = 0x2000, scoped, tag = 'input window, operand 1, single buffered']
    #allocation6 [shape = 's32[1]{0}', space=sflag, size = 0x4, scoped, tag = 'scoped memory for tpu_custom_call.1']
    #allocation7 [shape = 'u8[8192]{0}', space=vmem, size = 0x2000, scoped, tag = 'output window, operand 0, single buffered']
    %7 = vsyncpa [#allocation3], 0
    %8 = vsyncpa [#allocation6], 0
    %9 = vsyncpa [#allocation4], 0
    // Predicated region
    $region2: #{tpu_custom_call.1} parent=1 // pred_check
      _
    $region3: #{tpu_custom_call.1} parent=1 // pred_check_branch
      %11 = sbr.rel (0) target = $region5
    $region4: #{tpu_custom_call.1} parent=1 // pred_region
      %s13 = ssub.s32 16, 16
      %14 = vsyncadd [#allocation3], %s13
      %s16 = sshll.u32 [#allocation2], 4
      %s17 = int_to_ptr.vmem [resolvable:$true] %s16
      %19 = dma.hbm_to_vmem [thread:$0]  %s0, 16, %s17, [#allocation3]
    $region5: #{tpu_custom_call.1} parent=1 // pred_fallthru
      _
    // Predicated region
    $region6: #{tpu_custom_call.1} parent=1 // pred_check
      _
    $region7: #{tpu_custom_call.1} parent=1 // pred_check_branch
      %21 = sbr.rel (0) target = $region9
    $region8: #{tpu_custom_call.1} parent=1 // pred_region
      %s23 = ssub.s32 256, 256
      %24 = vsyncadd [#allocation6], %s23
      %s25 = sshll.u32 [#allocation5], 4
      %s26 = int_to_ptr.vmem [resolvable:$true] %s25
      %31 = dma.hbm_to_vmem [thread:$0]  %s1, 256, %s26, [#allocation6], 128, 128, 8
    $region9: #{tpu_custom_call.1} parent=1 // pred_fallthru
      _
    // Predicated region
    $region10: #{tpu_custom_call.1} parent=1 // pred_check
      _
    $region11: #{tpu_custom_call.1} parent=1 // pred_check_branch
      %33 = sbr.rel (0) target = $region13
    $region12: #{tpu_custom_call.1} parent=1 // pred_region
      %34 = dma.done [#allocation3], 16
    $region13: #{tpu_custom_call.1} parent=1 // pred_fallthru
      _
    // Predicated region
    $region14: #{tpu_custom_call.1} parent=1 // pred_check
      _
    $region15: #{tpu_custom_call.1} parent=1 // pred_check_branch
      %36 = sbr.rel (0) target = $region17
    $region16: #{tpu_custom_call.1} parent=1 // pred_region
      %37 = dma.done [#allocation6], 256
    $region17: #{tpu_custom_call.1} parent=1 // pred_fallthru
      _
    %v38 = vld [vmem:[#allocation2] sm:$0x1]
    %v39 = vlaneseq
    %v40 = vshrl.u32 %v39, 7
    %v41 = vadd.s32 %v40, 8
    %v42 = vlaneseq
    %v43 = vshrl.u32 %v42, 7
    %v44 = vsub.s32 0, %v43
    %v45 = vrot.slane %v38, %v44
    %vm46 = vcmp.eq.s32.totalorder %v40, %v45
    %vm47 = vcmp.eq.s32.totalorder %v41, %v45
    %v48 = vsel %vm46, 1, 0
    %v49 = vsel %vm47, 1, 0
    %v50 = vcvt.s32.f32 %v48
    %v51 = vcvt.s32.f32 %v49
    %v52 = vld [vmem:[#allocation5] sm:$0xff]
    %v53 = vld [vmem:[#allocation5 + $0x8] sm:$0xff]
    %54 = vxpose.xlu0.b32.start [1/16] %v50, 128
    %55 = vxpose.xlu0.b32.cont [2/16] %v51, 128
    %56 = vxpose.xlu0.b32.cont [3/16] 0.0, 128
    %57 = vxpose.xlu0.b32.cont [4/16] 0.0, 128
    %58 = vxpose.xlu0.b32.cont [5/16] 0.0, 128
    %59 = vxpose.xlu0.b32.cont [6/16] 0.0, 128
    %60 = vxpose.xlu0.b32.cont [7/16] 0.0, 128
    %61 = vxpose.xlu0.b32.cont [8/16] 0.0, 128
    %62 = vxpose.xlu0.b32.cont [9/16] 0.0, 128
    %63 = vxpose.xlu0.b32.cont [10/16] 0.0, 128
    %64 = vxpose.xlu0.b32.cont [11/16] 0.0, 128
    %65 = vxpose.xlu0.b32.cont [12/16] 0.0, 128
    %66 = vxpose.xlu0.b32.cont [13/16] 0.0, 128
    %67 = vxpose.xlu0.b32.cont [14/16] 0.0, 128
    %68 = vxpose.xlu0.b32.cont [15/16] 0.0, 128
    %69 = vxpose.xlu0.b32.end [16/16] 0.0, 128
    %v70 = vpop.trf.xlu0
    %v71 = vpop.trf.xlu0
    %v72 = vpop.trf.xlu0
    %v73 = vpop.trf.xlu0
    %v74 = vpop.trf.xlu0
    %v75 = vpop.trf.xlu0
    %v76 = vpop.trf.xlu0
    %v77 = vpop.trf.xlu0
    %v78 = vpop.trf.xlu0
    %v79 = vpop.trf.xlu0
    %v80 = vpop.trf.xlu0
    %v81 = vpop.trf.xlu0
    %v82 = vpop.trf.xlu0
    %v83 = vpop.trf.xlu0
    %v84 = vpop.trf.xlu0
    %v85 = vpop.trf.xlu0
    %vm86 = vcmask 130048
    %v88 = vsel %vm86, %v70, 0
    %v91 = vsel %vm86, %v71, 0
    %93 = vmatprep.subr.mxu0 0.0
    %94 = vmatpush1.msra.mxu0 0.0
    %95 = vmatprep.subr.mxu0 0.0
    %96 = vmatpush1.msra.mxu0 0.0
    %97 = vmatprep.subr.mxu0 0.0
    %98 = vmatpush1.msra.mxu0 0.0
    %99 = vmatprep.subr.mxu0 0.0
    %100 = vmatpush1.msra.mxu0 0.0
    %101 = vmatprep.subr.mxu0 0.0
    %102 = vmatpush1.msra.mxu0 0.0
    %103 = vmatprep.subr.mxu0 0.0
    %104 = vmatpush1.msra.mxu0 0.0
    %105 = vmatprep.subr.mxu0 0.0
    %106 = vmatpush1.msra.mxu0 0.0
    %107 = vmatprep.subr.mxu0 0.0
    %108 = vmatpush1.msra.mxu0 0.0
    %109 = vmatprep.subr.mxu0 0.0
    %110 = vmatpush1.msra.mxu0 0.0
    %111 = vmatprep.subr.mxu0 0.0
    %112 = vmatpush1.msra.mxu0 0.0
    %113 = vmatprep.subr.mxu0 0.0
    %114 = vmatpush1.msra.mxu0 0.0
    %115 = vmatprep.subr.mxu0 0.0
    %116 = vmatpush1.msra.mxu0 0.0
    %117 = vmatprep.subr.mxu0 0.0
    %118 = vmatpush1.msra.mxu0 0.0
    %119 = vmatprep.subr.mxu0 0.0
    %120 = vmatpush1.msra.mxu0 0.0
    %121 = vmatprep.subr.mxu0 0.0
    %v122 = vand.u32 %v53, 4294901760
    %123 = vmatpush1.msra.mxu0 %v122
    %124 = vmatprep.subr.mxu0 0.0
    %v125 = vand.u32 %v52, 4294901760
    %126 = vmatpush1.msra.mxu0 %v125
    %127 = vmatprep.subr.mxu0 0.0
    %128 = vmatpush2.msra.mxu0 0.0
    %129 = vmatprep.subr.mxu0 0.0
    %130 = vmatpush2.msra.mxu0 0.0
    %131 = vmatprep.subr.mxu0 0.0
    %132 = vmatpush2.msra.mxu0 0.0
    %133 = vmatprep.subr.mxu0 0.0
    %134 = vmatpush2.msra.mxu0 0.0
    %135 = vmatprep.subr.mxu0 0.0
    %136 = vmatpush2.msra.mxu0 0.0
    %137 = vmatprep.subr.mxu0 0.0
    %138 = vmatpush2.msra.mxu0 0.0
    %139 = vmatprep.subr.mxu0 0.0
    %140 = vmatpush2.msra.mxu0 0.0
    %141 = vmatprep.subr.mxu0 0.0
    %142 = vmatpush2.msra.mxu0 0.0
    %143 = vmatprep.subr.mxu0 0.0
    %144 = vmatpush2.msra.mxu0 0.0
    %145 = vmatprep.subr.mxu0 0.0
    %146 = vmatpush2.msra.mxu0 0.0
    %147 = vmatprep.subr.mxu0 0.0
    %148 = vmatpush2.msra.mxu0 0.0
    %149 = vmatprep.subr.mxu0 0.0
    %150 = vmatpush2.msra.mxu0 0.0
    %151 = vmatprep.subr.mxu0 0.0
    %152 = vmatpush2.msra.mxu0 0.0
    %153 = vmatprep.subr.mxu0 0.0
    %154 = vmatpush2.msra.mxu0 0.0
    %155 = vmatprep.subr.mxu0 0.0
    %156 = vmatpush2.msra.mxu0 0.0
    %157 = vmatprep.subr.mxu0 0.0
    %158 = vmatpush2.msra.mxu0 0.0
    %159 = vmatprep.mubr.f32.mxu0 0.0
    %v160 = vand.u32 %v88, 4294901760
    %v161 = vsub.f32 %v88, %v160
    %v162 = vand.u32 %v161, 4294901760
    %v163 = vsub.f32 %v161, %v162
    %v164 = vand.u32 %v163, 4294901760
    %165 = vmatmul.mubr.f32.gmra.mxu0 %v164
    %v166 = vpop.f32.mrf.mxu0
    %v167 = vadd.f32 0.0, %v166
    %v168 = vpop.f32.mrf.mxu0
    %169 = vmatprep.mubr.f32.mxu0 0.0
    %v170 = vand.u32 %v91, 4294901760
    %v171 = vsub.f32 %v91, %v170
    %v172 = vand.u32 %v171, 4294901760
    %v173 = vsub.f32 %v171, %v172
    %v174 = vand.u32 %v173, 4294901760
    %175 = vmatmul.mubr.f32.gmra.mxu0 %v174
    %v176 = vpop.f32.mrf.mxu0
    %v177 = vadd.f32 0.0, %v176
    %v178 = vpop.f32.mrf.mxu0
    %179 = vdwg.mxu0
    %180 = vmatprep.subr.mxu0 0.0
    %181 = vmatpush1.msra.mxu0 0.0
    %182 = vmatprep.subr.mxu0 0.0
    %183 = vmatpush1.msra.mxu0 0.0
    %184 = vmatprep.subr.mxu0 0.0
    %185 = vmatpush1.msra.mxu0 0.0
    %186 = vmatprep.subr.mxu0 0.0
    %187 = vmatpush1.msra.mxu0 0.0
    %188 = vmatprep.subr.mxu0 0.0
    %189 = vmatpush1.msra.mxu0 0.0
    %190 = vmatprep.subr.mxu0 0.0
    %191 = vmatpush1.msra.mxu0 0.0
    %192 = vmatprep.subr.mxu0 0.0
    %193 = vmatpush1.msra.mxu0 0.0
    %194 = vmatprep.subr.mxu0 0.0
    %195 = vmatpush1.msra.mxu0 0.0
    %196 = vmatprep.subr.mxu0 0.0
    %197 = vmatpush1.msra.mxu0 0.0
    %198 = vmatprep.subr.mxu0 0.0
    %199 = vmatpush1.msra.mxu0 0.0
    %200 = vmatprep.subr.mxu0 0.0
    %201 = vmatpush1.msra.mxu0 0.0
    %202 = vmatprep.subr.mxu0 0.0
    %203 = vmatpush1.msra.mxu0 0.0
    %204 = vmatprep.subr.mxu0 0.0
    %205 = vmatpush1.msra.mxu0 0.0
    %206 = vmatprep.subr.mxu0 0.0
    %207 = vmatpush1.msra.mxu0 0.0
    %208 = vmatprep.subr.mxu0 0.0
    %v209 = vand.u32 %v53, 4294901760
    %v210 = vsub.f32 %v53, %v209
    %v211 = vand.u32 %v210, 4294901760
    %v212 = vsub.f32 %v210, %v211
    %v213 = vand.u32 %v212, 4294901760
    %214 = vmatpush1.msra.mxu0 %v213
    %215 = vmatprep.subr.mxu0 0.0
    %v216 = vand.u32 %v52, 4294901760
    %v217 = vsub.f32 %v52, %v216
    %v218 = vand.u32 %v217, 4294901760
    %v219 = vsub.f32 %v217, %v218
    %v220 = vand.u32 %v219, 4294901760
    %221 = vmatpush1.msra.mxu0 %v220
    %222 = vmatprep.subr.mxu0 0.0
    %223 = vmatpush2.msra.mxu0 0.0
    %224 = vmatprep.subr.mxu0 0.0
    %225 = vmatpush2.msra.mxu0 0.0
    %226 = vmatprep.subr.mxu0 0.0
    %227 = vmatpush2.msra.mxu0 0.0
    %228 = vmatprep.subr.mxu0 0.0
    %229 = vmatpush2.msra.mxu0 0.0
    %230 = vmatprep.subr.mxu0 0.0
    %231 = vmatpush2.msra.mxu0 0.0
    %232 = vmatprep.subr.mxu0 0.0
    %233 = vmatpush2.msra.mxu0 0.0
    %234 = vmatprep.subr.mxu0 0.0
    %235 = vmatpush2.msra.mxu0 0.0
    %236 = vmatprep.subr.mxu0 0.0
    %237 = vmatpush2.msra.mxu0 0.0
    %238 = vmatprep.subr.mxu0 0.0
    %239 = vmatpush2.msra.mxu0 0.0
    %240 = vmatprep.subr.mxu0 0.0
    %241 = vmatpush2.msra.mxu0 0.0
    %242 = vmatprep.subr.mxu0 0.0
    %243 = vmatpush2.msra.mxu0 0.0
    %244 = vmatprep.subr.mxu0 0.0
    %245 = vmatpush2.msra.mxu0 0.0
    %246 = vmatprep.subr.mxu0 0.0
    %247 = vmatpush2.msra.mxu0 0.0
    %248 = vmatprep.subr.mxu0 0.0
    %249 = vmatpush2.msra.mxu0 0.0
    %250 = vmatprep.subr.mxu0 0.0
    %251 = vmatpush2.msra.mxu0 0.0
    %252 = vmatprep.subr.mxu0 0.0
    %253 = vmatpush2.msra.mxu0 0.0
    %254 = vmatprep.mubr.f32.mxu0 0.0
    %v255 = vand.u32 %v88, 4294901760
    %256 = vmatmul.mubr.f32.gmra.mxu0 %v255
    %v257 = vpop.f32.mrf.mxu0
    %v258 = vadd.f32 %v167, %v257
    %v259 = vpop.f32.mrf.mxu0
    %260 = vmatprep.mubr.f32.mxu0 0.0
    %v261 = vand.u32 %v91, 4294901760
    %262 = vmatmul.mubr.f32.gmra.mxu0 %v261
    %v263 = vpop.f32.mrf.mxu0
    %v264 = vadd.f32 %v177, %v263
    %v265 = vpop.f32.mrf.mxu0
    %266 = vdwg.mxu0
    %267 = vmatprep.subr.mxu0 0.0
    %268 = vmatpush1.msra.mxu0 0.0
    %269 = vmatprep.subr.mxu0 0.0
    %270 = vmatpush1.msra.mxu0 0.0
    %271 = vmatprep.subr.mxu0 0.0
    %272 = vmatpush1.msra.mxu0 0.0
    %273 = vmatprep.subr.mxu0 0.0
    %274 = vmatpush1.msra.mxu0 0.0
    %275 = vmatprep.subr.mxu0 0.0
    %276 = vmatpush1.msra.mxu0 0.0
    %277 = vmatprep.subr.mxu0 0.0
    %278 = vmatpush1.msra.mxu0 0.0
    %279 = vmatprep.subr.mxu0 0.0
    %280 = vmatpush1.msra.mxu0 0.0
    %281 = vmatprep.subr.mxu0 0.0
    %282 = vmatpush1.msra.mxu0 0.0
    %283 = vmatprep.subr.mxu0 0.0
    %284 = vmatpush1.msra.mxu0 0.0
    %285 = vmatprep.subr.mxu0 0.0
    %286 = vmatpush1.msra.mxu0 0.0
    %287 = vmatprep.subr.mxu0 0.0
    %288 = vmatpush1.msra.mxu0 0.0
    %289 = vmatprep.subr.mxu0 0.0
    %290 = vmatpush1.msra.mxu0 0.0
    %291 = vmatprep.subr.mxu0 0.0
    %292 = vmatpush1.msra.mxu0 0.0
    %293 = vmatprep.subr.mxu0 0.0
    %294 = vmatpush1.msra.mxu0 0.0
    %295 = vmatprep.subr.mxu0 0.0
    %v296 = vand.u32 %v53, 4294901760
    %v297 = vsub.f32 %v53, %v296
    %298 = vmatpush1.msra.mxu0 %v297
    %299 = vmatprep.subr.mxu0 0.0
    %v300 = vand.u32 %v52, 4294901760
    %v301 = vsub.f32 %v52, %v300
    %302 = vmatpush1.msra.mxu0 %v301
    %303 = vmatprep.subr.mxu0 0.0
    %304 = vmatpush2.msra.mxu0 0.0
    %305 = vmatprep.subr.mxu0 0.0
    %306 = vmatpush2.msra.mxu0 0.0
    %307 = vmatprep.subr.mxu0 0.0
    %308 = vmatpush2.msra.mxu0 0.0
    %309 = vmatprep.subr.mxu0 0.0
    %310 = vmatpush2.msra.mxu0 0.0
    %311 = vmatprep.subr.mxu0 0.0
    %312 = vmatpush2.msra.mxu0 0.0
    %313 = vmatprep.subr.mxu0 0.0
    %314 = vmatpush2.msra.mxu0 0.0
    %315 = vmatprep.subr.mxu0 0.0
    %316 = vmatpush2.msra.mxu0 0.0
    %317 = vmatprep.subr.mxu0 0.0
    %318 = vmatpush2.msra.mxu0 0.0
    %319 = vmatprep.subr.mxu0 0.0
    %320 = vmatpush2.msra.mxu0 0.0
    %321 = vmatprep.subr.mxu0 0.0
    %322 = vmatpush2.msra.mxu0 0.0
    %323 = vmatprep.subr.mxu0 0.0
    %324 = vmatpush2.msra.mxu0 0.0
    %325 = vmatprep.subr.mxu0 0.0
    %326 = vmatpush2.msra.mxu0 0.0
    %327 = vmatprep.subr.mxu0 0.0
    %328 = vmatpush2.msra.mxu0 0.0
    %329 = vmatprep.subr.mxu0 0.0
    %330 = vmatpush2.msra.mxu0 0.0
    %331 = vmatprep.subr.mxu0 0.0
    %332 = vmatpush2.msra.mxu0 0.0
    %333 = vmatprep.subr.mxu0 0.0
    %334 = vmatpush2.msra.mxu0 0.0
    %335 = vmatprep.mubr.f32.mxu0 0.0
    %v336 = vand.u32 %v88, 4294901760
    %v337 = vsub.f32 %v88, %v336
    %338 = vmatmul.mubr.f32.gmra.mxu0 %v337
    %v339 = vpop.f32.mrf.mxu0
    %v340 = vadd.f32 %v258, %v339
    %v341 = vpop.f32.mrf.mxu0
    %342 = vmatprep.mubr.f32.mxu0 0.0
    %v343 = vand.u32 %v91, 4294901760
    %v344 = vsub.f32 %v91, %v343
    %345 = vmatmul.mubr.f32.gmra.mxu0 %v344
    %v346 = vpop.f32.mrf.mxu0
    %v347 = vadd.f32 %v264, %v346
    %v348 = vpop.f32.mrf.mxu0
    %349 = vdwg.mxu0
    %350 = vmatprep.subr.mxu0 0.0
    %351 = vmatpush1.msra.mxu0 0.0
    %352 = vmatprep.subr.mxu0 0.0
    %353 = vmatpush1.msra.mxu0 0.0
    %354 = vmatprep.subr.mxu0 0.0
    %355 = vmatpush1.msra.mxu0 0.0
    %356 = vmatprep.subr.mxu0 0.0
    %357 = vmatpush1.msra.mxu0 0.0
    %358 = vmatprep.subr.mxu0 0.0
    %359 = vmatpush1.msra.mxu0 0.0
    %360 = vmatprep.subr.mxu0 0.0
    %361 = vmatpush1.msra.mxu0 0.0
    %362 = vmatprep.subr.mxu0 0.0
    %363 = vmatpush1.msra.mxu0 0.0
    %364 = vmatprep.subr.mxu0 0.0
    %365 = vmatpush1.msra.mxu0 0.0
    %366 = vmatprep.subr.mxu0 0.0
    %367 = vmatpush1.msra.mxu0 0.0
    %368 = vmatprep.subr.mxu0 0.0
    %369 = vmatpush1.msra.mxu0 0.0
    %370 = vmatprep.subr.mxu0 0.0
    %371 = vmatpush1.msra.mxu0 0.0
    %372 = vmatprep.subr.mxu0 0.0
    %373 = vmatpush1.msra.mxu0 0.0
    %374 = vmatprep.subr.mxu0 0.0
    %375 = vmatpush1.msra.mxu0 0.0
    %376 = vmatprep.subr.mxu0 0.0
    %377 = vmatpush1.msra.mxu0 0.0
    %378 = vmatprep.subr.mxu0 0.0
    %v379 = vand.u32 %v53, 4294901760
    %380 = vmatpush1.msra.mxu0 %v379
    %381 = vmatprep.subr.mxu0 0.0
    %v382 = vand.u32 %v52, 4294901760
    %383 = vmatpush1.msra.mxu0 %v382
    %384 = vmatprep.subr.mxu0 0.0
    %385 = vmatpush2.msra.mxu0 0.0
    %386 = vmatprep.subr.mxu0 0.0
    %387 = vmatpush2.msra.mxu0 0.0
    %388 = vmatprep.subr.mxu0 0.0
    %389 = vmatpush2.msra.mxu0 0.0
    %390 = vmatprep.subr.mxu0 0.0
    %391 = vmatpush2.msra.mxu0 0.0
    %392 = vmatprep.subr.mxu0 0.0
    %393 = vmatpush2.msra.mxu0 0.0
    %394 = vmatprep.subr.mxu0 0.0
    %395 = vmatpush2.msra.mxu0 0.0
    %396 = vmatprep.subr.mxu0 0.0
    %397 = vmatpush2.msra.mxu0 0.0
    %398 = vmatprep.subr.mxu0 0.0
    %399 = vmatpush2.msra.mxu0 0.0
    %400 = vmatprep.subr.mxu0 0.0
    %401 = vmatpush2.msra.mxu0 0.0
    %402 = vmatprep.subr.mxu0 0.0
    %403 = vmatpush2.msra.mxu0 0.0
    %404 = vmatprep.subr.mxu0 0.0
    %405 = vmatpush2.msra.mxu0 0.0
    %406 = vmatprep.subr.mxu0 0.0
    %407 = vmatpush2.msra.mxu0 0.0
    %408 = vmatprep.subr.mxu0 0.0
    %409 = vmatpush2.msra.mxu0 0.0
    %410 = vmatprep.subr.mxu0 0.0
    %411 = vmatpush2.msra.mxu0 0.0
    %412 = vmatprep.subr.mxu0 0.0
    %413 = vmatpush2.msra.mxu0 0.0
    %414 = vmatprep.subr.mxu0 0.0
    %415 = vmatpush2.msra.mxu0 0.0
    %416 = vmatprep.mubr.f32.mxu0 0.0
    %v417 = vand.u32 %v88, 4294901760
    %v418 = vsub.f32 %v88, %v417
    %v419 = vand.u32 %v418, 4294901760
    %420 = vmatmul.mubr.f32.gmra.mxu0 %v419
    %v421 = vpop.f32.mrf.mxu0
    %v422 = vadd.f32 %v340, %v421
    %v423 = vpop.f32.mrf.mxu0
    %424 = vmatprep.mubr.f32.mxu0 0.0
    %v425 = vand.u32 %v91, 4294901760
    %v426 = vsub.f32 %v91, %v425
    %v427 = vand.u32 %v426, 4294901760
    %428 = vmatmul.mubr.f32.gmra.mxu0 %v427
    %v429 = vpop.f32.mrf.mxu0
    %v430 = vadd.f32 %v347, %v429
    %v431 = vpop.f32.mrf.mxu0
    %432 = vdwg.mxu0
    %433 = vmatprep.subr.mxu0 0.0
    %434 = vmatpush1.msra.mxu0 0.0
    %435 = vmatprep.subr.mxu0 0.0
    %436 = vmatpush1.msra.mxu0 0.0
    %437 = vmatprep.subr.mxu0 0.0
    %438 = vmatpush1.msra.mxu0 0.0
    %439 = vmatprep.subr.mxu0 0.0
    %440 = vmatpush1.msra.mxu0 0.0
    %441 = vmatprep.subr.mxu0 0.0
    %442 = vmatpush1.msra.mxu0 0.0
    %443 = vmatprep.subr.mxu0 0.0
    %444 = vmatpush1.msra.mxu0 0.0
    %445 = vmatprep.subr.mxu0 0.0
    %446 = vmatpush1.msra.mxu0 0.0
    %447 = vmatprep.subr.mxu0 0.0
    %448 = vmatpush1.msra.mxu0 0.0
    %449 = vmatprep.subr.mxu0 0.0
    %450 = vmatpush1.msra.mxu0 0.0
    %451 = vmatprep.subr.mxu0 0.0
    %452 = vmatpush1.msra.mxu0 0.0
    %453 = vmatprep.subr.mxu0 0.0
    %454 = vmatpush1.msra.mxu0 0.0
    %455 = vmatprep.subr.mxu0 0.0
    %456 = vmatpush1.msra.mxu0 0.0
    %457 = vmatprep.subr.mxu0 0.0
    %458 = vmatpush1.msra.mxu0 0.0
    %459 = vmatprep.subr.mxu0 0.0
    %460 = vmatpush1.msra.mxu0 0.0
    %461 = vmatprep.subr.mxu0 0.0
    %v462 = vand.u32 %v53, 4294901760
    %v463 = vsub.f32 %v53, %v462
    %v464 = vand.u32 %v463, 4294901760
    %465 = vmatpush1.msra.mxu0 %v464
    %466 = vmatprep.subr.mxu0 0.0
    %v467 = vand.u32 %v52, 4294901760
    %v468 = vsub.f32 %v52, %v467
    %v469 = vand.u32 %v468, 4294901760
    %470 = vmatpush1.msra.mxu0 %v469
    %471 = vmatprep.subr.mxu0 0.0
    %472 = vmatpush2.msra.mxu0 0.0
    %473 = vmatprep.subr.mxu0 0.0
    %474 = vmatpush2.msra.mxu0 0.0
    %475 = vmatprep.subr.mxu0 0.0
    %476 = vmatpush2.msra.mxu0 0.0
    %477 = vmatprep.subr.mxu0 0.0
    %478 = vmatpush2.msra.mxu0 0.0
    %479 = vmatprep.subr.mxu0 0.0
    %480 = vmatpush2.msra.mxu0 0.0
    %481 = vmatprep.subr.mxu0 0.0
    %482 = vmatpush2.msra.mxu0 0.0
    %483 = vmatprep.subr.mxu0 0.0
    %484 = vmatpush2.msra.mxu0 0.0
    %485 = vmatprep.subr.mxu0 0.0
    %486 = vmatpush2.msra.mxu0 0.0
    %487 = vmatprep.subr.mxu0 0.0
    %488 = vmatpush2.msra.mxu0 0.0
    %489 = vmatprep.subr.mxu0 0.0
    %490 = vmatpush2.msra.mxu0 0.0
    %491 = vmatprep.subr.mxu0 0.0
    %492 = vmatpush2.msra.mxu0 0.0
    %493 = vmatprep.subr.mxu0 0.0
    %494 = vmatpush2.msra.mxu0 0.0
    %495 = vmatprep.subr.mxu0 0.0
    %496 = vmatpush2.msra.mxu0 0.0
    %497 = vmatprep.subr.mxu0 0.0
    %498 = vmatpush2.msra.mxu0 0.0
    %499 = vmatprep.subr.mxu0 0.0
    %500 = vmatpush2.msra.mxu0 0.0
    %501 = vmatprep.subr.mxu0 0.0
    %502 = vmatpush2.msra.mxu0 0.0
    %503 = vmatprep.mubr.f32.mxu0 0.0
    %v504 = vand.u32 %v88, 4294901760
    %505 = vmatmul.mubr.f32.gmra.mxu0 %v504
    %v506 = vpop.f32.mrf.mxu0
    %v507 = vadd.f32 %v422, %v506
    %v508 = vpop.f32.mrf.mxu0
    %509 = vmatprep.mubr.f32.mxu0 0.0
    %v510 = vand.u32 %v91, 4294901760
    %511 = vmatmul.mubr.f32.gmra.mxu0 %v510
    %v512 = vpop.f32.mrf.mxu0
    %v513 = vadd.f32 %v430, %v512
    %v514 = vpop.f32.mrf.mxu0
    %515 = vdwg.mxu0
    %516 = vmatprep.subr.mxu0 0.0
    %517 = vmatpush1.msra.mxu0 0.0
    %518 = vmatprep.subr.mxu0 0.0
    %519 = vmatpush1.msra.mxu0 0.0
    %520 = vmatprep.subr.mxu0 0.0
    %521 = vmatpush1.msra.mxu0 0.0
    %522 = vmatprep.subr.mxu0 0.0
    %523 = vmatpush1.msra.mxu0 0.0
    %524 = vmatprep.subr.mxu0 0.0
    %525 = vmatpush1.msra.mxu0 0.0
    %526 = vmatprep.subr.mxu0 0.0
    %527 = vmatpush1.msra.mxu0 0.0
    %528 = vmatprep.subr.mxu0 0.0
    %529 = vmatpush1.msra.mxu0 0.0
    %530 = vmatprep.subr.mxu0 0.0
    %531 = vmatpush1.msra.mxu0 0.0
    %532 = vmatprep.subr.mxu0 0.0
    %533 = vmatpush1.msra.mxu0 0.0
    %534 = vmatprep.subr.mxu0 0.0
    %535 = vmatpush1.msra.mxu0 0.0
    %536 = vmatprep.subr.mxu0 0.0
    %537 = vmatpush1.msra.mxu0 0.0
    %538 = vmatprep.subr.mxu0 0.0
    %539 = vmatpush1.msra.mxu0 0.0
    %540 = vmatprep.subr.mxu0 0.0
    %541 = vmatpush1.msra.mxu0 0.0
    %542 = vmatprep.subr.mxu0 0.0
    %543 = vmatpush1.msra.mxu0 0.0
    %544 = vmatprep.subr.mxu0 0.0
    %v545 = vand.u32 %v53, 4294901760
    %546 = vmatpush1.msra.mxu0 %v545
    %547 = vmatprep.subr.mxu0 0.0
    %v548 = vand.u32 %v52, 4294901760
    %549 = vmatpush1.msra.mxu0 %v548
    %550 = vmatprep.subr.mxu0 0.0
    %551 = vmatpush2.msra.mxu0 0.0
    %552 = vmatprep.subr.mxu0 0.0
    %553 = vmatpush2.msra.mxu0 0.0
    %554 = vmatprep.subr.mxu0 0.0
    %555 = vmatpush2.msra.mxu0 0.0
    %556 = vmatprep.subr.mxu0 0.0
    %557 = vmatpush2.msra.mxu0 0.0
    %558 = vmatprep.subr.mxu0 0.0
    %559 = vmatpush2.msra.mxu0 0.0
    %560 = vmatprep.subr.mxu0 0.0
    %561 = vmatpush2.msra.mxu0 0.0
    %562 = vmatprep.subr.mxu0 0.0
    %563 = vmatpush2.msra.mxu0 0.0
    %564 = vmatprep.subr.mxu0 0.0
    %565 = vmatpush2.msra.mxu0 0.0
    %566 = vmatprep.subr.mxu0 0.0
    %567 = vmatpush2.msra.mxu0 0.0
    %568 = vmatprep.subr.mxu0 0.0
    %569 = vmatpush2.msra.mxu0 0.0
    %570 = vmatprep.subr.mxu0 0.0
    %571 = vmatpush2.msra.mxu0 0.0
    %572 = vmatprep.subr.mxu0 0.0
    %573 = vmatpush2.msra.mxu0 0.0
    %574 = vmatprep.subr.mxu0 0.0
    %575 = vmatpush2.msra.mxu0 0.0
    %576 = vmatprep.subr.mxu0 0.0
    %577 = vmatpush2.msra.mxu0 0.0
    %578 = vmatprep.subr.mxu0 0.0
    %579 = vmatpush2.msra.mxu0 0.0
    %580 = vmatprep.subr.mxu0 0.0
    %581 = vmatpush2.msra.mxu0 0.0
    %582 = vmatprep.mubr.f32.mxu0 0.0
    %v583 = vand.u32 %v88, 4294901760
    %584 = vmatmul.mubr.f32.gmra.mxu0 %v583
    %v585 = vpop.f32.mrf.mxu0
    %v586 = vadd.f32 %v507, %v585
    %v587 = vpop.f32.mrf.mxu0
    %588 = vmatprep.mubr.f32.mxu0 0.0
    %v589 = vand.u32 %v91, 4294901760
    %590 = vmatmul.mubr.f32.gmra.mxu0 %v589
    %v591 = vpop.f32.mrf.mxu0
    %v592 = vadd.f32 %v513, %v591
    %v593 = vpop.f32.mrf.mxu0
    %594 = vdwg.mxu0
    %595 = vst [vmem:[#allocation7] sm:$0xff] %v586
    %596 = vst [vmem:[#allocation7 + $0x8] sm:$0xff] %v592
    // Predicated region
    $region18: #{tpu_custom_call.1} parent=1 // pred_check
      _
    $region19: #{tpu_custom_call.1} parent=1 // pred_check_branch
      %598 = sbr.rel (0) target = $region21
    $region20: #{tpu_custom_call.1} parent=1 // pred_region
      %s600 = ssub.s32 256, 256
      %601 = vsyncadd [#allocation4], %s600
      %s602 = sshll.u32 [#allocation7], 4
      %s603 = int_to_ptr.vmem [resolvable:$true] %s602
      %608 = dma.vmem_to_hbm [thread:$0]  %s603, 256, %s2, [#allocation4], 128, 128, 8
    $region21: #{tpu_custom_call.1} parent=1 // pred_fallthru
      _
    // Predicated region
    $region22: #{tpu_custom_call.1} parent=1 // pred_check
      _
    $region23: #{tpu_custom_call.1} parent=1 // pred_check_branch
      %610 = sbr.rel (0) target = $region25
    $region24: #{tpu_custom_call.1} parent=1 // pred_region
      %611 = dma.done [#allocation4], 256
    $region25: #{tpu_custom_call.1} parent=1 // pred_fallthru
      _
    %612 = vsyncpa [#allocation3], 1
    %613 = vsyncpa [#allocation6], 1
    %614 = vsyncpa [#allocation4], 1

</llo_original>
